<compile_context>
chip_gen: v7x
topology: tpu7x:2x2x1
jax: 0.10.0
libtpu: 0.0.40
codegen_flags: <defaults>
</compile_context>

<pallas_src>
import functools

import jax
import jax.numpy as jnp
from jax.experimental import pallas as pl
from jax.experimental.pallas import tpu as pltpu

SELU_ALPHA = 1.6732632423543772
SELU_SCALE = 1.0507009873554805

LANE = 128          # lane width / per-head column padding granularity
BLOCK_B_MAX = 2048  # batch-tile cap: >=512 rows is ~85% of HBM roofline; bigger adds nothing


def _round_up(n, m):
    return ((n + m - 1) // m) * m


def _expm1(x):
    # exp(x) - 1; avoids relying on an expm1 lowering. Forward-accuracy impact
    # vs. true expm1 is ~1e-7 absolute for SELU's negative branch.
    return jnp.exp(x) - 1.0


def _fused_heads_kernel(x_ref, w_ref, b_ref, *out_refs, lp, latent, h_size):
    """pre = x @ [w_mu|w_std|w_h] (per-head lane-padded). Per-head epilogues run
    on static lane-aligned slices so transcendentals touch only real columns."""
    pre = jnp.dot(x_ref[...], w_ref[...], preferred_element_type=jnp.float32)
    pre = pre + b_ref[...]

    mu_ref, std_ref = out_refs[0], out_refs[1]

    # mu head: columns [0, latent)
    mu_ref[...] = pre[:, :latent].astype(mu_ref.dtype)

    # std head: columns [lp, lp+latent)  (lane-aligned start)
    std_pre = pre[:, lp:lp + latent]
    std_ref[...] = jnp.exp(0.5 * std_pre).astype(std_ref.dtype)

    if h_size > 0:
        # h head: columns [2*lp, 2*lp+h_size)  (lane-aligned start)
        h_ref = out_refs[2]
        h_pre = pre[:, 2 * lp:2 * lp + h_size]
        h_val = SELU_SCALE * jnp.where(h_pre > 0.0, h_pre, SELU_ALPHA * _expm1(h_pre))
        h_ref[...] = h_val.astype(h_ref.dtype)


def _pick_tile_and_vmem(B, IN, n_pad, out_cols):
    """Generation-aware batch tile + scoped-VMEM limit from actual tile bytes."""
    try:
        phys = pltpu.get_tpu_info().vmem_capacity_bytes   # 128 MiB v5e/v6e, 64 MiB v7x
    except Exception:
        phys = 64 * 1024 * 1024                            # assume smallest (v7x)
    budget = min(phys * 5 // 8, 80 * 1024 * 1024)          # 80 MiB v5e/v6e, 40 MiB v7x

    # Per-batch-row VMEM bytes: double-buffered x + double-buffered outputs
    # + the (tb, n_pad) f32 matmul slab.
    per_row = 4 * (2 * IN + n_pad + 2 * out_cols)
    resident = 4 * 2 * (IN * n_pad + n_pad)                # weights + bias (2 bufs)
    avail = max(budget - resident - (2 << 20), per_row)

    tb = avail // per_row
    tb = max((tb // 256) * 256, 512)                       # MXU-friendly, >=512-row floor
    tb = min(tb, BLOCK_B_MAX)
    if B > 1024:
        # keep >=2 batch tiles so v7x's two TensorCores both get work
        tb = min(tb, _round_up((B + 1) // 2, 256))
    tb = min(tb, B)

    need = per_row * tb + resident + (4 << 20)             # + headroom for compiler scratch
    vmem_limit = min(max(need, 32 << 20), phys * 3 // 4)   # never the full physical VMEM
    return int(tb), int(vmem_limit)


def params_inference(x, w_mu, b_mu, w_std, b_std, w_h=None, b_h=None,
                     *, out_dtype=jnp.float32):
    """x: (B, in); w_*: (in, out) already weight-normed (W = g*V/||V||, transposed);
    b_*: (1, out).  Pass out_dtype=jnp.bfloat16 to halve output HBM traffic if the
    consumer tolerates it (compute stays f32)."""
    x = x.astype(jnp.float32)
    B, IN = x.shape
    L = w_mu.shape[1]
    H = 0 if w_h is None else w_h.shape[1]

    Lp = _round_up(L, LANE)
    Hp = _round_up(H, LANE) if H > 0 else 0
    n_pad = 2 * Lp + Hp

    def pad_cols(a, width):
        a = a.astype(jnp.float32)
        return a if a.shape[1] == width else jnp.pad(a, ((0, 0), (0, width - a.shape[1])))

    # Build the concatenated, per-head lane-padded weight/bias once (outside the kernel).
    w_parts = [pad_cols(w_mu, Lp), pad_cols(w_std, Lp)]
    b_parts = [pad_cols(b_mu.reshape(1, -1), Lp), pad_cols(b_std.reshape(1, -1), Lp)]
    if H > 0:
        w_parts.append(pad_cols(w_h, Hp))
        b_parts.append(pad_cols(b_h.reshape(1, -1), Hp))
    w_cat = jnp.concatenate(w_parts, axis=1)
    b_cat = jnp.concatenate(b_parts, axis=1)

    out_cols = 2 * L + H
    tb, vmem_limit = _pick_tile_and_vmem(B, IN, n_pad, out_cols)
    grid = (pl.cdiv(B, tb),)

    out_shapes = [jax.ShapeDtypeStruct((B, L), out_dtype),
                  jax.ShapeDtypeStruct((B, L), out_dtype)]
    out_specs = [pl.BlockSpec((tb, L), lambda i: (i, 0)),
                 pl.BlockSpec((tb, L), lambda i: (i, 0))]
    if H > 0:
        out_shapes.append(jax.ShapeDtypeStruct((B, H), out_dtype))
        out_specs.append(pl.BlockSpec((tb, H), lambda i: (i, 0)))

    out_bytes = jnp.dtype(out_dtype).itemsize
    cost = pl.CostEstimate(
        flops=2 * B * IN * n_pad,
        transcendentals=B * (L + H),               # exp on std cols + expm1 on h cols only
        bytes_accessed=4 * (B * IN + IN * n_pad + n_pad) + out_bytes * B * out_cols,
    )

    outs = pl.pallas_call(
        functools.partial(_fused_heads_kernel, lp=Lp, latent=L, h_size=H),
        out_shape=tuple(out_shapes),
        grid=grid,
        in_specs=[
            pl.BlockSpec((tb, IN), lambda i: (i, 0)),     # batch-tiled activations
            pl.BlockSpec((IN, n_pad), lambda i: (0, 0)),  # weights resident across grid
            pl.BlockSpec((1, n_pad), lambda i: (0, 0)),   # bias resident across grid
        ],
        out_specs=tuple(out_specs),
        compiler_params=pltpu.CompilerParams(
            dimension_semantics=("parallel",),            # v7x: split batch over 2 TCs
            vmem_limit_bytes=vmem_limit,
        ),
        cost_estimate=cost,
    )(x, w_cat, b_cat)

    mu, std = outs[0], outs[1]
    h = outs[2] if H > 0 else None
    return mu, std, h


def make_weight_norm_linear(key, in_features, out_features):
    """Deterministically build a weight-normed Linear: W = g * V / ||V||_row, b.
    (weight_norm's reparameterization is parameter-only, so it is folded here.)"""
    kv, kg, kb = jax.random.split(key, 3)
    V = jax.random.normal(kv, (out_features, in_features), dtype=jnp.float32) * 0.1
    g = 1.0 + 0.1 * jax.random.normal(kg, (out_features,), dtype=jnp.float32)
    b = 0.05 * jax.random.normal(kb, (out_features,), dtype=jnp.float32)
    row_norm = jnp.sqrt(jnp.sum(V * V, axis=1, keepdims=True))
    W = (g[:, None] * V) / row_norm                      # (out, in), PyTorch convention
    return W.T, b.reshape(1, out_features)               # (in, out), (1, out)


def reference(x, w_mu, b_mu, w_std, b_std, w_h, b_h):
    hi = jax.lax.Precision.HIGHEST
    mu = jnp.dot(x, w_mu, precision=hi) + b_mu
    std = jnp.exp(0.5 * (jnp.dot(x, w_std, precision=hi) + b_std))
    h_pre = jnp.dot(x, w_h, precision=hi) + b_h
    h = SELU_SCALE * jnp.where(h_pre > 0, h_pre, SELU_ALPHA * jnp.expm1(h_pre))
    return mu, std, h


if __name__ == "__main__":
    # Small shapes consistent with the module's forward:
    # input: (batch, input_size); latent_size and h_size outputs.
    batch, input_size, latent_size, h_size = 8, 32, 16, 24

    key = jax.random.PRNGKey(0)
    kx, kmu, kstd, kh = jax.random.split(key, 4)

    x = jax.random.normal(kx, (batch, input_size), dtype=jnp.float32)
    w_mu, b_mu = make_weight_norm_linear(kmu, input_size, latent_size)
    w_std, b_std = make_weight_norm_linear(kstd, input_size, latent_size)
    w_h, b_h = make_weight_norm_linear(kh, input_size, h_size)

    mu, std, h = params_inference(x, w_mu, b_mu, w_std, b_std, w_h, b_h)
    jax.block_until_ready((mu, std, h))

    # Check against plain-JAX reference.
    mu_r, std_r, h_r = reference(x, w_mu, b_mu, w_std, b_std, w_h, b_h)
    assert mu.shape == (batch, latent_size)
    assert std.shape == (batch, latent_size)
    assert h.shape == (batch, h_size)
    assert jnp.allclose(mu, mu_r, atol=1e-4, rtol=1e-4)
    assert jnp.allclose(std, std_r, atol=1e-4, rtol=1e-4)
    assert jnp.allclose(h, h_r, atol=1e-4, rtol=1e-4)

    print("KERNEL_OK")
</pallas_src>

<mosaic_0001>
module attributes {stable_mosaic.version = 11 : i64} {
  func.func @_fused_heads_kernel(%arg0: i32, %arg1: memref<8x32xf32, #tpu.memory_space<vmem>>, %arg2: memref<32x384xf32, #tpu.memory_space<vmem>>, %arg3: memref<1x384xf32, #tpu.memory_space<vmem>>, %arg4: memref<8x16xf32, #tpu.memory_space<vmem>>, %arg5: memref<8x16xf32, #tpu.memory_space<vmem>>, %arg6: memref<8x24xf32, #tpu.memory_space<vmem>>) attributes {dimension_semantics = [#tpu.dimension_semantics<parallel>], iteration_bounds = array<i64: 1>, scalar_prefetch = 0 : i64, scratch_operands = 0 : i64, tpu.core_type = #tpu.core_type<tc>, window_params = [{transform_indices = @transform_0, window_bounds = array<i64: 8, 32>}, {pipeline_mode = #tpu.pipeline_mode<synchronous>, transform_indices = @transform_1, window_bounds = array<i64: 32, 384>}, {pipeline_mode = #tpu.pipeline_mode<synchronous>, transform_indices = @transform_2, window_bounds = array<i64: 1, 384>}, {transform_indices = @transform_3, window_bounds = array<i64: 8, 16>}, {transform_indices = @transform_4, window_bounds = array<i64: 8, 16>}, {transform_indices = @transform_5, window_bounds = array<i64: 8, 24>}]} {
    %c0 = arith.constant 0 : index
    %c0_0 = arith.constant 0 : index
    %0 = vector.load %arg1[%c0, %c0_0] : memref<8x32xf32, #tpu.memory_space<vmem>>, vector<8x32xf32>
    %c0_1 = arith.constant 0 : index
    %c0_2 = arith.constant 0 : index
    %1 = vector.load %arg2[%c0_1, %c0_2] : memref<32x384xf32, #tpu.memory_space<vmem>>, vector<32x384xf32>
    %cst = arith.constant dense<0.000000e+00> : vector<8x384xf32>
    %2 = tpu.matmul %0, %1, %cst {dimension_numbers = #tpu.dot_dimension_numbers<[1], [0], [0], [1], [0, 0, 1, 1], [], []>} : vector<8x32xf32>, vector<32x384xf32>, vector<8x384xf32> -> vector<8x384xf32>
    %c0_3 = arith.constant 0 : index
    %c0_4 = arith.constant 0 : index
    %3 = vector.load %arg3[%c0_3, %c0_4] : memref<1x384xf32, #tpu.memory_space<vmem>>, vector<1x384xf32>
    %4 = vector.broadcast %3 : vector<1x384xf32> to vector<8x384xf32>
    %5 = arith.addf %2, %4 : vector<8x384xf32>
    %6 = vector.extract_strided_slice %5 {offsets = [0, 0], sizes = [8, 16], strides = [1, 1]} : vector<8x384xf32> to vector<8x16xf32>
    %c0_5 = arith.constant 0 : index
    %c0_6 = arith.constant 0 : index
    %7 = vector.load %arg4[%c0_5, %c0_6] : memref<8x16xf32, #tpu.memory_space<vmem>>, vector<8x16xf32>
    tpu.vector_store %arg4[%c0_5, %c0_6], %6 {strides = array<i32>} : memref<8x16xf32, #tpu.memory_space<vmem>>, vector<8x16xf32>,
    %8 = vector.extract_strided_slice %5 {offsets = [0, 128], sizes = [8, 16], strides = [1, 1]} : vector<8x384xf32> to vector<8x16xf32>
    %cst_7 = arith.constant 5.000000e-01 : f32
    %9 = vector.broadcast %cst_7 : f32 to vector<8x16xf32>
    %10 = arith.mulf %9, %8 : vector<8x16xf32>
    %11 = math.exp %10 : vector<8x16xf32>
    %c0_8 = arith.constant 0 : index
    %c0_9 = arith.constant 0 : index
    %12 = vector.load %arg5[%c0_8, %c0_9] : memref<8x16xf32, #tpu.memory_space<vmem>>, vector<8x16xf32>
    tpu.vector_store %arg5[%c0_8, %c0_9], %11 {strides = array<i32>} : memref<8x16xf32, #tpu.memory_space<vmem>>, vector<8x16xf32>,
    %13 = vector.extract_strided_slice %5 {offsets = [0, 256], sizes = [8, 24], strides = [1, 1]} : vector<8x384xf32> to vector<8x24xf32>
    %cst_10 = arith.constant 0.000000e+00 : f32
    %14 = vector.broadcast %cst_10 : f32 to vector<8x24xf32>
    %15 = arith.cmpf ogt, %13, %14 : vector<8x24xf32>
    %16 = math.exp %13 : vector<8x24xf32>
    %cst_11 = arith.constant 1.000000e+00 : f32
    %17 = vector.broadcast %cst_11 : f32 to vector<8x24xf32>
    %18 = arith.subf %16, %17 : vector<8x24xf32>
    %cst_12 = arith.constant 1.67326319 : f32
    %19 = vector.broadcast %cst_12 : f32 to vector<8x24xf32>
    %20 = arith.mulf %19, %18 : vector<8x24xf32>
    %21 = arith.select %15, %13, %20 : vector<8x24xi1>, vector<8x24xf32>
    %cst_13 = arith.constant 1.05070102 : f32
    %22 = vector.broadcast %cst_13 : f32 to vector<8x24xf32>
    %23 = arith.mulf %22, %21 : vector<8x24xf32>
    %c0_14 = arith.constant 0 : index
    %c0_15 = arith.constant 0 : index
    %24 = vector.load %arg6[%c0_14, %c0_15] : memref<8x24xf32, #tpu.memory_space<vmem>>, vector<8x24xf32>
    tpu.vector_store %arg6[%c0_14, %c0_15], %23 {strides = array<i32>} : memref<8x24xf32, #tpu.memory_space<vmem>>, vector<8x24xf32>,
    return
  }
  func.func @transform_0(%arg0: i32) -> (i32, i32) {
    %c0_i32 = arith.constant 0 : i32
    %c0_i32_0 = arith.constant 0 : i32
    return %arg0, %c0_i32 : i32, i32
  }
  func.func @transform_1(%arg0: i32) -> (i32, i32) {
    %c0_i32 = arith.constant 0 : i32
    %c0_i32_0 = arith.constant 0 : i32
    %c0_i32_1 = arith.constant 0 : i32
    return %c0_i32, %c0_i32_0 : i32, i32
  }
  func.func @transform_2(%arg0: i32) -> (i32, i32) {
    %c0_i32 = arith.constant 0 : i32
    %c0_i32_0 = arith.constant 0 : i32
    %c0_i32_1 = arith.constant 0 : i32
    return %c0_i32, %c0_i32_0 : i32, i32
  }
  func.func @transform_3(%arg0: i32) -> (i32, i32) {
    %c0_i32 = arith.constant 0 : i32
    %c0_i32_0 = arith.constant 0 : i32
    return %arg0, %c0_i32 : i32, i32
  }
  func.func @transform_4(%arg0: i32) -> (i32, i32) {
    %c0_i32 = arith.constant 0 : i32
    %c0_i32_0 = arith.constant 0 : i32
    return %arg0, %c0_i32 : i32, i32
  }
  func.func @transform_5(%arg0: i32) -> (i32, i32) {
    %c0_i32 = arith.constant 0 : i32
    %c0_i32_0 = arith.constant 0 : i32
    return %arg0, %c0_i32 : i32, i32
  }
}

</mosaic_0001>

<llo_original>
// kernel: tpu_custom_call.1
$region0: #{tpu_custom_call.1}
  #allocation0 [shape = 'u32[]', space=smem, size = 0x4, offset = 0x4, fixed_abs, tag = 'smem constant byte address 0x4 - core index']
  #allocation1 [shape = 'u32[144,128]{1,0:T(1,128)}', space=vmem, size = 0x12000, scoped, tag = 'internal scratch']
  %s0 = inlined_call_operand.hbm [shape: f32[8,32], index: 0, kind: input, shape index: {}]
  %s1 = inlined_call_operand.hbm [shape: f32[32,384], index: 1, kind: input, shape index: {}]
  %s2 = inlined_call_operand.vmem [shape: f32[1,384], index: 2, kind: input, shape index: {}]
  %s3 = inlined_call_operand.hbm [shape: f32[8,16], index: 3, kind: output, shape index: {0}]
  %s4 = inlined_call_operand.hbm [shape: f32[8,16], index: 4, kind: output, shape index: {1}]
  %s5 = inlined_call_operand.hbm [shape: f32[8,24], index: 5, kind: output, shape index: {2}]
  %6 = xla_tuple %s3, %s4, %s5
  %s7 = sld [smem:[#allocation0]]
  $region46: #{tpu_custom_call.1} parent=0
    _
  %s9 = ssub.s32 1, %s7
  %s10 = scalar_select 0, %s9, %s7
  $region1: #{tpu_custom_call.1} parent=0
    #allocation2 [shape = 'u8[4096]{0}', space=vmem, size = 0x1000, scoped, tag = 'input window, operand 0, single buffered']
    #allocation3 [shape = 's32[1]{0}', space=sflag, size = 0x4, scoped, tag = 'scoped memory for tpu_custom_call.1']
    #allocation4 [shape = 's32[1]{0}', space=sflag, size = 0x4, scoped, tag = 'scoped memory for tpu_custom_call.1']
    #allocation5 [shape = 'u8[49152]{0}', space=vmem, size = 0xc000, scoped, tag = 'input window, operand 1, single buffered']
    #allocation6 [shape = 's32[1]{0}', space=sflag, size = 0x4, scoped, tag = 'scoped memory for tpu_custom_call.1']
    #allocation7 [shape = 'u8[4096]{0}', space=vmem, size = 0x1000, scoped, tag = 'output window, operand 0, single buffered']
    #allocation8 [shape = 'u8[4096]{0}', space=vmem, size = 0x1000, scoped, tag = 'output window, operand 1, single buffered']
    #allocation9 [shape = 's32[1]{0}', space=sflag, size = 0x4, scoped, tag = 'scoped memory for tpu_custom_call.1']
    #allocation10 [shape = 'u8[4096]{0}', space=vmem, size = 0x1000, scoped, tag = 'output window, operand 2, single buffered']
    %11 = vsyncpa [#allocation3], 0
    %12 = vsyncpa [#allocation6], 0
    %13 = vsyncpa [#allocation4], 0
    %14 = vsyncpa [#allocation9], 0
    // Predicated region
    $region2: #{tpu_custom_call.1} parent=1 // pred_check
      _
    $region3: #{tpu_custom_call.1} parent=1 // pred_check_branch
      %16 = sbr.rel (0) target = $region5
    $region4: #{tpu_custom_call.1} parent=1 // pred_region
      %s18 = ssub.s32 128, 128
      %19 = vsyncadd [#allocation3], %s18
      %s21 = sshll.u32 [#allocation2], 4
      %s22 = int_to_ptr.vmem [resolvable:$true] %s21
      %24 = dma.hbm_to_vmem [thread:$0]  %s0, 128, %s22, [#allocation3]
    $region5: #{tpu_custom_call.1} parent=1 // pred_fallthru
      _
    // Predicated region
    $region6: #{tpu_custom_call.1} parent=1 // pred_check
      _
    $region7: #{tpu_custom_call.1} parent=1 // pred_check_branch
      %26 = sbr.rel (0) target = $region9
    $region8: #{tpu_custom_call.1} parent=1 // pred_region
      %s28 = ssub.s32 1536, 1536
      %29 = vsyncadd [#allocation6], %s28
      %s30 = sshll.u32 [#allocation5], 4
      %s31 = int_to_ptr.vmem [resolvable:$true] %s30
      %36 = dma.hbm_to_vmem [thread:$0]  %s1, 1536, %s31, [#allocation6], 384, 384, 24
    $region9: #{tpu_custom_call.1} parent=1 // pred_fallthru
      _
    // Predicated region
    $region10: #{tpu_custom_call.1} parent=1 // pred_check
      _
    $region11: #{tpu_custom_call.1} parent=1 // pred_check_branch
      %38 = sbr.rel (0) target = $region13
    $region12: #{tpu_custom_call.1} parent=1 // pred_region
      _
    $region13: #{tpu_custom_call.1} parent=1 // pred_fallthru
      _
    // Predicated region
    $region14: #{tpu_custom_call.1} parent=1 // pred_check
      _
    $region15: #{tpu_custom_call.1} parent=1 // pred_check_branch
      %40 = sbr.rel (0) target = $region17
    $region16: #{tpu_custom_call.1} parent=1 // pred_region
      %41 = dma.done [#allocation3], 128
    $region17: #{tpu_custom_call.1} parent=1 // pred_fallthru
      _
    // Predicated region
    $region18: #{tpu_custom_call.1} parent=1 // pred_check
      _
    $region19: #{tpu_custom_call.1} parent=1 // pred_check_branch
      %43 = sbr.rel (0) target = $region21
    $region20: #{tpu_custom_call.1} parent=1 // pred_region
      %44 = dma.done [#allocation6], 1536
    $region21: #{tpu_custom_call.1} parent=1 // pred_fallthru
      _
    %v45 = vld [vmem:[#allocation2] sm:$0xff]
    %v46 = vld [vmem:[#allocation5] sm:$0xff]
    %v47 = vld [vmem:[#allocation5 + $0x8] sm:$0xff]
    %v48 = vld [vmem:[#allocation5 + $0x10] sm:$0xff]
    %v49 = vld [vmem:[#allocation5 + $0x18] sm:$0xff]
    %v50 = vld [vmem:[#allocation5 + $0x20] sm:$0xff]
    %v51 = vld [vmem:[#allocation5 + $0x28] sm:$0xff]
    %v52 = vld [vmem:[#allocation5 + $0x30] sm:$0xff]
    %v53 = vld [vmem:[#allocation5 + $0x38] sm:$0xff]
    %v54 = vld [vmem:[#allocation5 + $0x40] sm:$0xff]
    %v55 = vld [vmem:[#allocation5 + $0x48] sm:$0xff]
    %v56 = vld [vmem:[#allocation5 + $0x50] sm:$0xff]
    %v57 = vld [vmem:[#allocation5 + $0x58] sm:$0xff]
    %v58 = vld [vmem:[%s2] sm:$0x7]
    %v60 = vlaneseq
    %v61 = vshrl.u32 %v60, 7
    %v62 = vsub.s32 0, %v61
    %v63 = vrot.slane %v58, %v62
    %v64 = vlaneseq
    %v65 = vshrl.u32 %v64, 7
    %v66 = vsub.s32 1, %v65
    %v67 = vrot.slane %v58, %v66
    %v68 = vlaneseq
    %v69 = vshrl.u32 %v68, 7
    %v70 = vsub.s32 2, %v69
    %v71 = vrot.slane %v58, %v70
    %vm75 = vcmask 261120
    %v77 = vsel %vm75, %v45, 0
    %79 = vmatprep.subr.mxu0 %v47
    %80 = vmatpush1.msra.mxu0 %v46
    %81 = vmatprep.subr.mxu0 %v50
    %82 = vmatpush1.msra.mxu0 %v49
    %83 = vmatprep.subr.mxu0 %v53
    %84 = vmatpush1.msra.mxu0 %v52
    %85 = vmatprep.subr.mxu0 %v56
    %86 = vmatpush1.msra.mxu0 %v55
    %87 = vmatprep.subr.mxu0 0.0
    %88 = vmatpush1.msra.mxu0 0.0
    %89 = vmatprep.subr.mxu0 0.0
    %90 = vmatpush1.msra.mxu0 0.0
    %91 = vmatprep.subr.mxu0 0.0
    %92 = vmatpush1.msra.mxu0 0.0
    %93 = vmatprep.subr.mxu0 0.0
    %94 = vmatpush1.msra.mxu0 0.0
    %95 = vmatprep.subr.mxu0 0.0
    %96 = vmatpush1.msra.mxu0 0.0
    %97 = vmatprep.subr.mxu0 0.0
    %98 = vmatpush1.msra.mxu0 0.0
    %99 = vmatprep.subr.mxu0 0.0
    %100 = vmatpush1.msra.mxu0 0.0
    %101 = vmatprep.subr.mxu0 0.0
    %102 = vmatpush1.msra.mxu0 0.0
    %103 = vmatprep.subr.mxu0 0.0
    %104 = vmatpush1.msra.mxu0 0.0
    %105 = vmatprep.subr.mxu0 0.0
    %106 = vmatpush1.msra.mxu0 0.0
    %107 = vmatprep.subr.mxu0 0.0
    %108 = vmatpush1.msra.mxu0 0.0
    %109 = vmatprep.subr.mxu0 0.0
    %110 = vmatpush1.msra.mxu0 0.0
    %111 = vmatprep.subr.mxu0 0.0
    %112 = vmatpush1.msra.mxu0 0.0
    %113 = vmatprep.subr.mxu0 0.0
    %114 = vmatpush1.msra.mxu0 0.0
    %115 = vmatprep.subr.mxu0 0.0
    %116 = vmatpush1.msra.mxu0 0.0
    %117 = vmatprep.subr.mxu0 0.0
    %118 = vmatpush1.msra.mxu0 0.0
    %119 = vmatprep.subr.mxu0 0.0
    %120 = vmatpush1.msra.mxu0 0.0
    %121 = vmatprep.subr.mxu0 0.0
    %122 = vmatpush1.msra.mxu0 0.0
    %123 = vmatprep.subr.mxu0 0.0
    %124 = vmatpush1.msra.mxu0 0.0
    %125 = vmatprep.subr.mxu0 0.0
    %126 = vmatpush1.msra.mxu0 0.0
    %127 = vmatprep.subr.mxu0 0.0
    %128 = vmatpush1.msra.mxu0 0.0
    %129 = vmatprep.subr.mxu0 0.0
    %130 = vmatpush1.msra.mxu0 0.0
    %131 = vmatprep.subr.mxu0 0.0
    %132 = vmatpush1.msra.mxu0 0.0
    %133 = vmatprep.subr.mxu0 0.0
    %134 = vmatpush1.msra.mxu0 0.0
    %135 = vmatprep.subr.mxu0 0.0
    %136 = vmatpush1.msra.mxu0 0.0
    %137 = vmatprep.subr.mxu0 0.0
    %138 = vmatpush1.msra.mxu0 0.0
    %139 = vmatprep.subr.mxu0 0.0
    %140 = vmatpush1.msra.mxu0 0.0
    %141 = vmatprep.subr.mxu0 0.0
    %142 = vmatpush1.msra.mxu0 0.0
    %143 = vmatprep.mubr.f32.mxu0 0.0
    %144 = vmatmul.mubr.f32.gmra.mrb[0].mxu0 %v77
    %v145 = vpop.f32.mrb[0].mxu0
    %v146 = vadd.f32 %v63, %v145
    %v147 = vpop.f32.mrb[0].mxu0
    %v148 = vadd.f32 %v67, %v147
    %149 = vdwg.mxu0
    %150 = vmatprep.subr.mxu0 0.0
    %151 = vmatpush1.msra.mxu0 %v48
    %152 = vmatprep.subr.mxu0 0.0
    %153 = vmatpush1.msra.mxu0 %v51
    %154 = vmatprep.subr.mxu0 0.0
    %155 = vmatpush1.msra.mxu0 %v54
    %156 = vmatprep.subr.mxu0 0.0
    %157 = vmatpush1.msra.mxu0 %v57
    %158 = vmatprep.subr.mxu0 0.0
    %159 = vmatpush1.msra.mxu0 0.0
    %160 = vmatprep.subr.mxu0 0.0
    %161 = vmatpush1.msra.mxu0 0.0
    %162 = vmatprep.subr.mxu0 0.0
    %163 = vmatpush1.msra.mxu0 0.0
    %164 = vmatprep.subr.mxu0 0.0
    %165 = vmatpush1.msra.mxu0 0.0
    %166 = vmatprep.subr.mxu0 0.0
    %167 = vmatpush1.msra.mxu0 0.0
    %168 = vmatprep.subr.mxu0 0.0
    %169 = vmatpush1.msra.mxu0 0.0
    %170 = vmatprep.subr.mxu0 0.0
    %171 = vmatpush1.msra.mxu0 0.0
    %172 = vmatprep.subr.mxu0 0.0
    %173 = vmatpush1.msra.mxu0 0.0
    %174 = vmatprep.subr.mxu0 0.0
    %175 = vmatpush1.msra.mxu0 0.0
    %176 = vmatprep.subr.mxu0 0.0
    %177 = vmatpush1.msra.mxu0 0.0
    %178 = vmatprep.subr.mxu0 0.0
    %179 = vmatpush1.msra.mxu0 0.0
    %180 = vmatprep.subr.mxu0 0.0
    %181 = vmatpush1.msra.mxu0 0.0
    %182 = vmatprep.subr.mxu0 0.0
    %183 = vmatpush1.msra.mxu0 0.0
    %184 = vmatprep.subr.mxu0 0.0
    %185 = vmatpush1.msra.mxu0 0.0
    %186 = vmatprep.subr.mxu0 0.0
    %187 = vmatpush1.msra.mxu0 0.0
    %188 = vmatprep.subr.mxu0 0.0
    %189 = vmatpush1.msra.mxu0 0.0
    %190 = vmatprep.subr.mxu0 0.0
    %191 = vmatpush1.msra.mxu0 0.0
    %192 = vmatprep.subr.mxu0 0.0
    %193 = vmatpush1.msra.mxu0 0.0
    %194 = vmatprep.subr.mxu0 0.0
    %195 = vmatpush1.msra.mxu0 0.0
    %196 = vmatprep.subr.mxu0 0.0
    %197 = vmatpush1.msra.mxu0 0.0
    %198 = vmatprep.subr.mxu0 0.0
    %199 = vmatpush1.msra.mxu0 0.0
    %200 = vmatprep.subr.mxu0 0.0
    %201 = vmatpush1.msra.mxu0 0.0
    %202 = vmatprep.subr.mxu0 0.0
    %203 = vmatpush1.msra.mxu0 0.0
    %204 = vmatprep.subr.mxu0 0.0
    %205 = vmatpush1.msra.mxu0 0.0
    %206 = vmatprep.subr.mxu0 0.0
    %207 = vmatpush1.msra.mxu0 0.0
    %208 = vmatprep.subr.mxu0 0.0
    %209 = vmatpush1.msra.mxu0 0.0
    %210 = vmatprep.subr.mxu0 0.0
    %211 = vmatpush1.msra.mxu0 0.0
    %212 = vmatprep.subr.mxu0 0.0
    %213 = vmatpush1.msra.mxu0 0.0
    %214 = vmatprep.mubr.f32.mxu0 0.0
    %215 = vmatmul.mubr.f32.gmra.mrb[0].mxu0 %v77
    %v216 = vpop.f32.mrb[0].mxu0
    %v217 = vadd.f32 %v71, %v216
    %v218 = vpop.f32.mrb[0].mxu0
    %219 = vdwg.mxu0
    %vm220 = vcmask 130048
    %221 = vst.msk [vmem:[#allocation7] sm:$0xff] %vm220, %v146
    %v222 = vmul.f32 %v148, 0.5
    %v223 = vmul.f32 %v222, 1.442695
    %v224 = vpow.pop %v223
    %225 = vst.msk [vmem:[#allocation8] sm:$0xff] %vm220, %v224
    %vm226 = vcmp.gt.f32.partialorder %v217, 0.0
    %v227 = vmul.f32 %v217, 1.442695
    %v228 = vpow.pop %v227
    %v229 = vsub.f32 %v228, 1.0
    %v230 = vmul.f32 %v229, 1.6732632
    %v231 = vsel %vm226, %v217, %v230
    %v232 = vmul.f32 %v231, 1.050701
    %vm233 = vcmask 195584
    %234 = vst.msk [vmem:[#allocation10] sm:$0xff] %vm233, %v232
    // Predicated region
    $region22: #{tpu_custom_call.1} parent=1 // pred_check
      _
    $region23: #{tpu_custom_call.1} parent=1 // pred_check_branch
      %236 = sbr.rel (0) target = $region25
    $region24: #{tpu_custom_call.1} parent=1 // pred_region
      %s238 = ssub.s32 128, 128
      %239 = vsyncadd [#allocation4], %s238
      %s241 = sshll.u32 [#allocation7], 4
      %s242 = int_to_ptr.vmem [resolvable:$true] %s241
      %244 = dma.vmem_to_hbm [thread:$0]  %s242, 128, %s3, [#allocation4]
    $region25: #{tpu_custom_call.1} parent=1 // pred_fallthru
      _
    // Predicated region
    $region26: #{tpu_custom_call.1} parent=1 // pred_check
      _
    $region27: #{tpu_custom_call.1} parent=1 // pred_check_branch
      %246 = sbr.rel (0) target = $region29
    $region28: #{tpu_custom_call.1} parent=1 // pred_region
      %s248 = ssub.s32 128, 128
      %249 = vsyncadd [#allocation9], %s248
      %s251 = sshll.u32 [#allocation8], 4
      %s252 = int_to_ptr.vmem [resolvable:$true] %s251
      %254 = dma.vmem_to_hbm [thread:$0]  %s252, 128, %s4, [#allocation9]
    $region29: #{tpu_custom_call.1} parent=1 // pred_fallthru
      _
    // Predicated region
    $region30: #{tpu_custom_call.1} parent=1 // pred_check
      _
    $region31: #{tpu_custom_call.1} parent=1 // pred_check_branch
      %256 = sbr.rel (0) target = $region33
    $region32: #{tpu_custom_call.1} parent=1 // pred_region
      %s258 = ssub.s32 128, 128
      %259 = vsyncadd [#allocation9], %s258
      %s261 = sshll.u32 [#allocation10], 4
      %s262 = int_to_ptr.vmem [resolvable:$true] %s261
      %264 = dma.vmem_to_hbm [thread:$0]  %s262, 128, %s5, [#allocation9]
    $region33: #{tpu_custom_call.1} parent=1 // pred_fallthru
      _
    // Predicated region
    $region34: #{tpu_custom_call.1} parent=1 // pred_check
      _
    $region35: #{tpu_custom_call.1} parent=1 // pred_check_branch
      %266 = sbr.rel (0) target = $region37
    $region36: #{tpu_custom_call.1} parent=1 // pred_region
      %267 = dma.done [#allocation4], 128
    $region37: #{tpu_custom_call.1} parent=1 // pred_fallthru
      _
    // Predicated region
    $region38: #{tpu_custom_call.1} parent=1 // pred_check
      _
    $region39: #{tpu_custom_call.1} parent=1 // pred_check_branch
      %269 = sbr.rel (0) target = $region41
    $region40: #{tpu_custom_call.1} parent=1 // pred_region
      %270 = dma.done [#allocation9], 128
    $region41: #{tpu_custom_call.1} parent=1 // pred_fallthru
      _
    // Predicated region
    $region42: #{tpu_custom_call.1} parent=1 // pred_check
      _
    $region43: #{tpu_custom_call.1} parent=1 // pred_check_branch
      %272 = sbr.rel (0) target = $region45
    $region44: #{tpu_custom_call.1} parent=1 // pred_region
      %273 = dma.done [#allocation9], 128
    $region45: #{tpu_custom_call.1} parent=1 // pred_fallthru
      _
    %274 = vsyncpa [#allocation3], 1
    %275 = vsyncpa [#allocation6], 1
    %276 = vsyncpa [#allocation4], 1
    %277 = vsyncpa [#allocation9], 1

</llo_original>
